<compile_context>
chip_gen: v6e
topology: v6e:2x2x1
jax: 0.10.0
libtpu: 0.0.40
codegen_flags: <defaults>
</compile_context>

<pallas_src>
import jax
import jax.numpy as jnp
from jax.experimental import pallas as pl
from jax.experimental.pallas import tpu as pltpu

_EPS = 1e-5


def _round_up(x: int, m: int) -> int:
    return (x + m - 1) // m * m


def _hard_dice_kernel(pred_ref, targ_ref, dice_ref, inter_acc, denom_acc):
    j = pl.program_id(1)

    @pl.when(j == 0)
    def _():
        inter_acc[...] = jnp.zeros_like(inter_acc)
        denom_acc[...] = jnp.zeros_like(denom_acc)

    # Threshold in native dtype; widen only for the reductions (f32 accum).
    thr = jnp.asarray(0.5, dtype=pred_ref.dtype)
    pf = (pred_ref[...] > thr).astype(jnp.float32)
    tf = (targ_ref[...] > thr).astype(jnp.float32)
    # Fused denom reduce: sum(p) + sum(t) == sum(p + t)  -> one XLU reduce.
    inter_acc[...] += jnp.sum(pf * tf, axis=1, keepdims=True)
    denom_acc[...] += jnp.sum(pf + tf, axis=1, keepdims=True)

    @pl.when(j == pl.num_programs(1) - 1)
    def _():
        dice_ref[...] = (2.0 * inter_acc[...] + _EPS) / (denom_acc[...] + _EPS)


def hard_dice(pred: jax.Array, targ: jax.Array) -> jax.Array:
    """Mean hard Dice coefficient over (batch, channel). Inputs: NCHW."""
    assert pred.shape == targ.shape
    N, C, H, W = pred.shape
    BC, HW = N * C, H * W

    pred2d = pred.reshape(BC, HW)
    targ2d = targ.reshape(BC, HW)

    # Tile sizes: sublane-dense rows (multiple of 8), lane-dense cols
    # (multiple of 128), bounded so 2 inputs x 2 pipeline buffers stay well
    # under every generation's VMEM (worst case 128*2048*4B*4 = 4 MiB).
    TILE_HW = min(_round_up(HW, 128), 2048)
    TILE_BC = min(_round_up(BC, 8), 128)
    HW_pad = _round_up(HW, TILE_HW)
    BC_pad = _round_up(BC, TILE_BC)

    if (BC_pad, HW_pad) != (BC, HW):
        pad = ((0, BC_pad - BC), (0, HW_pad - HW))
        pred2d = jnp.pad(pred2d, pad)  # zeros threshold to 0: no contribution
        targ2d = jnp.pad(targ2d, pad)

    grid = (BC_pad // TILE_BC, HW_pad // TILE_HW)

    dice = pl.pallas_call(
        _hard_dice_kernel,
        out_shape=jax.ShapeDtypeStruct((BC_pad, 1), jnp.float32),
        grid_spec=pltpu.PrefetchScalarGridSpec(
            num_scalar_prefetch=0,
            grid=grid,
            in_specs=[
                pl.BlockSpec((TILE_BC, TILE_HW), lambda i, j: (i, j)),
                pl.BlockSpec((TILE_BC, TILE_HW), lambda i, j: (i, j)),
            ],
            out_specs=pl.BlockSpec((TILE_BC, 1), lambda i, j: (i, 0)),
            scratch_shapes=[
                pltpu.VMEM((TILE_BC, 1), jnp.float32),
                pltpu.VMEM((TILE_BC, 1), jnp.float32),
            ],
        ),
        compiler_params=pltpu.CompilerParams(
            dimension_semantics=("parallel", "arbitrary"),
            vmem_limit_bytes=32 * 1024 * 1024,
        ),
    )(pred2d, targ2d)

    # Mean over the real (batch, channel) rows; padded rows are dropped here.
    return jnp.mean(dice[:BC, 0])


def _hard_dice_ref(pred, targ):
    p = (pred > 0.5).astype(jnp.float32)
    t = (targ > 0.5).astype(jnp.float32)
    inter = jnp.sum(p * t, axis=(2, 3))
    denom = jnp.sum(p, axis=(2, 3)) + jnp.sum(t, axis=(2, 3))
    dice = (2.0 * inter + _EPS) / (denom + _EPS)
    return jnp.mean(dice)


if __name__ == "__main__":
    key = jax.random.PRNGKey(0)
    k1, k2 = jax.random.split(key)
    N, C, H, W = 2, 4, 16, 16
    pred = jax.random.uniform(k1, (N, C, H, W), dtype=jnp.float32)
    targ = (jax.random.uniform(k2, (N, C, H, W), dtype=jnp.float32) > 0.5).astype(
        jnp.float32
    )

    result = jax.block_until_ready(hard_dice(pred, targ))
    expected = jax.block_until_ready(_hard_dice_ref(pred, targ))
    assert jnp.allclose(result, expected, rtol=1e-5, atol=1e-6), (result, expected)
    print("KERNEL_OK")
</pallas_src>

<mosaic_0001>
module attributes {stable_mosaic.version = 11 : i64} {
  func.func @_hard_dice_kernel(%arg0: i32, %arg1: i32, %arg2: memref<8x256xf32, #tpu.memory_space<vmem>>, %arg3: memref<8x256xf32, #tpu.memory_space<vmem>>, %arg4: memref<8x1xf32, #tpu.memory_space<vmem>>, %arg5: memref<8x1xf32, #tpu.memory_space<vmem>>, %arg6: memref<8x1xf32, #tpu.memory_space<vmem>>) attributes {dimension_semantics = [#tpu.dimension_semantics<parallel>, #tpu.dimension_semantics<arbitrary>], iteration_bounds = array<i64: 1, 1>, scalar_prefetch = 0 : i64, scratch_operands = 2 : i64, tpu.core_type = #tpu.core_type<tc>, window_params = [{transform_indices = @transform_0, window_bounds = array<i64: 8, 256>}, {transform_indices = @transform_1, window_bounds = array<i64: 8, 256>}, {transform_indices = @transform_2, window_bounds = array<i64: 8, 1>}]} {
    %c0_i32 = arith.constant 0 : i32
    %0 = arith.cmpi eq, %arg1, %c0_i32 : i32
    %1 = arith.extui %0 : i1 to i32
    %c0_i32_0 = arith.constant 0 : i32
    %2 = arith.cmpi ne, %1, %c0_i32_0 : i32
    scf.if %2 {
      %cst_17 = arith.constant 0.000000e+00 : f32
      %28 = vector.broadcast %cst_17 : f32 to vector<8x1xf32>
      %c0_18 = arith.constant 0 : index
      %c0_19 = arith.constant 0 : index
      %29 = vector.load %arg5[%c0_18, %c0_19] : memref<8x1xf32, #tpu.memory_space<vmem>>, vector<8x1xf32>
      tpu.vector_store %arg5[%c0_18, %c0_19], %28 {strides = array<i32>} : memref<8x1xf32, #tpu.memory_space<vmem>>, vector<8x1xf32>,
      %cst_20 = arith.constant 0.000000e+00 : f32
      %30 = vector.broadcast %cst_20 : f32 to vector<8x1xf32>
      %c0_21 = arith.constant 0 : index
      %c0_22 = arith.constant 0 : index
      %31 = vector.load %arg6[%c0_21, %c0_22] : memref<8x1xf32, #tpu.memory_space<vmem>>, vector<8x1xf32>
      tpu.vector_store %arg6[%c0_21, %c0_22], %30 {strides = array<i32>} : memref<8x1xf32, #tpu.memory_space<vmem>>, vector<8x1xf32>,
    } else {
    }
    %c0 = arith.constant 0 : index
    %c0_1 = arith.constant 0 : index
    %3 = vector.load %arg2[%c0, %c0_1] : memref<8x256xf32, #tpu.memory_space<vmem>>, vector<8x256xf32>
    %cst = arith.constant 5.000000e-01 : f32
    %4 = vector.broadcast %cst : f32 to vector<8x256xf32>
    %5 = arith.cmpf ogt, %3, %4 : vector<8x256xf32>
    %6 = arith.extui %5 : vector<8x256xi1> to vector<8x256xi32>
    %7 = arith.sitofp %6 : vector<8x256xi32> to vector<8x256xf32>
    %c0_2 = arith.constant 0 : index
    %c0_3 = arith.constant 0 : index
    %8 = vector.load %arg3[%c0_2, %c0_3] : memref<8x256xf32, #tpu.memory_space<vmem>>, vector<8x256xf32>
    %cst_4 = arith.constant 5.000000e-01 : f32
    %9 = vector.broadcast %cst_4 : f32 to vector<8x256xf32>
    %10 = arith.cmpf ogt, %8, %9 : vector<8x256xf32>
    %11 = arith.extui %10 : vector<8x256xi1> to vector<8x256xi32>
    %12 = arith.sitofp %11 : vector<8x256xi32> to vector<8x256xf32>
    %c0_5 = arith.constant 0 : index
    %c0_6 = arith.constant 0 : index
    %13 = vector.load %arg5[%c0_5, %c0_6] : memref<8x1xf32, #tpu.memory_space<vmem>>, vector<8x1xf32>
    %14 = arith.mulf %7, %12 : vector<8x256xf32>
    %cst_7 = arith.constant dense<0.000000e+00> : vector<8xf32>
    %15 = vector.multi_reduction <add>, %14, %cst_7 [1] : vector<8x256xf32> to vector<8xf32>
    %16 = vector.shape_cast %15 : vector<8xf32> to vector<8x1xf32>
    %17 = arith.addf %13, %16 : vector<8x1xf32>
    %c0_8 = arith.constant 0 : index
    %c0_9 = arith.constant 0 : index
    %18 = vector.load %arg5[%c0_8, %c0_9] : memref<8x1xf32, #tpu.memory_space<vmem>>, vector<8x1xf32>
    tpu.vector_store %arg5[%c0_8, %c0_9], %17 {strides = array<i32>} : memref<8x1xf32, #tpu.memory_space<vmem>>, vector<8x1xf32>,
    %c0_10 = arith.constant 0 : index
    %c0_11 = arith.constant 0 : index
    %19 = vector.load %arg6[%c0_10, %c0_11] : memref<8x1xf32, #tpu.memory_space<vmem>>, vector<8x1xf32>
    %20 = arith.addf %7, %12 : vector<8x256xf32>
    %cst_12 = arith.constant dense<0.000000e+00> : vector<8xf32>
    %21 = vector.multi_reduction <add>, %20, %cst_12 [1] : vector<8x256xf32> to vector<8xf32>
    %22 = vector.shape_cast %21 : vector<8xf32> to vector<8x1xf32>
    %23 = arith.addf %19, %22 : vector<8x1xf32>
    %c0_13 = arith.constant 0 : index
    %c0_14 = arith.constant 0 : index
    %24 = vector.load %arg6[%c0_13, %c0_14] : memref<8x1xf32, #tpu.memory_space<vmem>>, vector<8x1xf32>
    tpu.vector_store %arg6[%c0_13, %c0_14], %23 {strides = array<i32>} : memref<8x1xf32, #tpu.memory_space<vmem>>, vector<8x1xf32>,
    %c0_i32_15 = arith.constant 0 : i32
    %25 = arith.cmpi eq, %arg1, %c0_i32_15 : i32
    %26 = arith.extui %25 : i1 to i32
    %c0_i32_16 = arith.constant 0 : i32
    %27 = arith.cmpi ne, %26, %c0_i32_16 : i32
    scf.if %27 {
      %c0_17 = arith.constant 0 : index
      %c0_18 = arith.constant 0 : index
      %28 = vector.load %arg5[%c0_17, %c0_18] : memref<8x1xf32, #tpu.memory_space<vmem>>, vector<8x1xf32>
      %cst_19 = arith.constant 2.000000e+00 : f32
      %29 = vector.broadcast %cst_19 : f32 to vector<8x1xf32>
      %30 = arith.mulf %29, %28 : vector<8x1xf32>
      %cst_20 = arith.constant 9.99999974E-6 : f32
      %31 = vector.broadcast %cst_20 : f32 to vector<8x1xf32>
      %32 = arith.addf %30, %31 : vector<8x1xf32>
      %c0_21 = arith.constant 0 : index
      %c0_22 = arith.constant 0 : index
      %33 = vector.load %arg6[%c0_21, %c0_22] : memref<8x1xf32, #tpu.memory_space<vmem>>, vector<8x1xf32>
      %cst_23 = arith.constant 9.99999974E-6 : f32
      %34 = vector.broadcast %cst_23 : f32 to vector<8x1xf32>
      %35 = arith.addf %33, %34 : vector<8x1xf32>
      %36 = arith.divf %32, %35 : vector<8x1xf32>
      %c0_24 = arith.constant 0 : index
      %c0_25 = arith.constant 0 : index
      %37 = vector.load %arg4[%c0_24, %c0_25] : memref<8x1xf32, #tpu.memory_space<vmem>>, vector<8x1xf32>
      tpu.vector_store %arg4[%c0_24, %c0_25], %36 {strides = array<i32>} : memref<8x1xf32, #tpu.memory_space<vmem>>, vector<8x1xf32>,
    } else {
    }
    return
  }
  func.func @transform_0(%arg0: i32, %arg1: i32) -> (i32, i32) {
    %c0_i32 = arith.constant 0 : i32
    return %arg0, %arg1 : i32, i32
  }
  func.func @transform_1(%arg0: i32, %arg1: i32) -> (i32, i32) {
    %c0_i32 = arith.constant 0 : i32
    return %arg0, %arg1 : i32, i32
  }
  func.func @transform_2(%arg0: i32, %arg1: i32) -> (i32, i32) {
    %c0_i32 = arith.constant 0 : i32
    %c0_i32_0 = arith.constant 0 : i32
    return %arg0, %c0_i32 : i32, i32
  }
}

</mosaic_0001>

<llo_original>
// kernel: tpu_custom_call.1
$region0: #{tpu_custom_call.1}
  #allocation0 [shape = 'u32[]', space=smem, size = 0x4, offset = 0x4, fixed_abs, tag = 'smem constant byte address 0x4 - core index']
  #allocation1 [shape = 'u32[144,128]{1,0:T(1,128)}', space=vmem, size = 0x12000, scoped, tag = 'internal scratch']
  #allocation2 [shape = 'f32[8,1]{1,0:T(8,128)}', space=vmem, size = 0x1000, scoped, tag = 'scratch operand']
  #allocation3 [shape = 'f32[8,1]{1,0:T(8,128)}', space=vmem, size = 0x1000, scoped, tag = 'scratch operand']
  %s0 = inlined_call_operand.hbm [shape: f32[8,256], index: 0, kind: input, shape index: {}]
  %s1 = inlined_call_operand.hbm [shape: f32[8,256], index: 1, kind: input, shape index: {}]
  %s2 = inlined_call_operand.vmem [shape: f32[8,1], index: 2, kind: output, shape index: {}]
  %s3 = sld [smem:[#allocation0]]
  $region34: #{tpu_custom_call.1} parent=0
    _
  %s5 = ssub.s32 1, %s3
  %s6 = scalar_select 0, %s5, %s3
  $region1: #{tpu_custom_call.1} parent=0
    #allocation4 [shape = 'u8[8192]{0}', space=vmem, size = 0x2000, scoped, tag = 'input window, operand 0, single buffered']
    #allocation5 [shape = 's32[1]{0}', space=sflag, size = 0x4, scoped, tag = 'scoped memory for tpu_custom_call.1']
    #allocation6 [shape = 'u8[8192]{0}', space=vmem, size = 0x2000, scoped, tag = 'input window, operand 1, single buffered']
    #allocation7 [shape = 's32[1]{0}', space=sflag, size = 0x4, scoped, tag = 'scoped memory for tpu_custom_call.1']
    %7 = vsyncpa [#allocation5], 0
    %8 = vsyncpa [#allocation7], 0
    // Predicated region
    $region2: #{tpu_custom_call.1} parent=1 // pred_check
      _
    $region3: #{tpu_custom_call.1} parent=1 // pred_check_branch
      %10 = sbr.rel (0) target = $region5
    $region4: #{tpu_custom_call.1} parent=1 // pred_region
      %s12 = ssub.s32 256, 256
      %13 = vsyncadd [#allocation5], %s12
      %s15 = sshll.u32 [#allocation4], 4
      %s16 = int_to_ptr.vmem [resolvable:$true] %s15
      %18 = dma.hbm_to_vmem [thread:$0]  %s0, 256, %s16, [#allocation5]
    $region5: #{tpu_custom_call.1} parent=1 // pred_fallthru
      _
    // Predicated region
    $region6: #{tpu_custom_call.1} parent=1 // pred_check
      _
    $region7: #{tpu_custom_call.1} parent=1 // pred_check_branch
      %20 = sbr.rel (0) target = $region9
    $region8: #{tpu_custom_call.1} parent=1 // pred_region
      %s22 = ssub.s32 256, 256
      %23 = vsyncadd [#allocation7], %s22
      %s25 = sshll.u32 [#allocation6], 4
      %s26 = int_to_ptr.vmem [resolvable:$true] %s25
      %28 = dma.hbm_to_vmem [thread:$0]  %s1, 256, %s26, [#allocation7]
    $region9: #{tpu_custom_call.1} parent=1 // pred_fallthru
      _
    // Predicated region
    $region10: #{tpu_custom_call.1} parent=1 // pred_check
      _
    $region11: #{tpu_custom_call.1} parent=1 // pred_check_branch
      %30 = sbr.rel (0) target = $region13
    $region12: #{tpu_custom_call.1} parent=1 // pred_region
      %31 = dma.done [#allocation5], 256
    $region13: #{tpu_custom_call.1} parent=1 // pred_fallthru
      _
    // Predicated region
    $region14: #{tpu_custom_call.1} parent=1 // pred_check
      _
    $region15: #{tpu_custom_call.1} parent=1 // pred_check_branch
      %33 = sbr.rel (0) target = $region17
    $region16: #{tpu_custom_call.1} parent=1 // pred_region
      %34 = dma.done [#allocation7], 256
    $region17: #{tpu_custom_call.1} parent=1 // pred_fallthru
      _
    %p35 = scmp.eq.s32.totalorder 0, 0
    // Predicated region
    $region18: #{tpu_custom_call.1} parent=1 // pred_check
      %p36 = pneg %p35
    $region19: #{tpu_custom_call.1} parent=1 // pred_check_branch
      %38 = sbr.rel (%p36) target = $region21
    $region20: #{tpu_custom_call.1} parent=1 // pred_region
      %vm39 = vcmask 7168
      %40 = vst.msk [vmem:[#allocation2] sm:$0xff] %vm39, 0.0
      %41 = vst.msk [vmem:[#allocation3] sm:$0xff] %vm39, 0.0
    $region21: #{tpu_custom_call.1} parent=1 // pred_fallthru
      _
    %v42 = vld [vmem:[#allocation4] sm:$0xff]
    %v43 = vld [vmem:[#allocation4 + $0x8] sm:$0xff]
    %vm44 = vcmp.gt.f32.partialorder %v42, 0.5
    %vm45 = vcmp.gt.f32.partialorder %v43, 0.5
    %v46 = vsel %vm44, 1, 0
    %v47 = vsel %vm45, 1, 0
    %v48 = vcvt.s32.f32 %v46
    %v49 = vcvt.s32.f32 %v47
    %v50 = vld [vmem:[#allocation6] sm:$0xff]
    %v51 = vld [vmem:[#allocation6 + $0x8] sm:$0xff]
    %vm52 = vcmp.gt.f32.partialorder %v50, 0.5
    %vm53 = vcmp.gt.f32.partialorder %v51, 0.5
    %v54 = vsel %vm52, 1, 0
    %v55 = vsel %vm53, 1, 0
    %v56 = vcvt.s32.f32 %v54
    %v57 = vcvt.s32.f32 %v55
    %v58 = vld [vmem:[#allocation2] sm:$0xff]
    %v59 = vmul.f32 %v48, %v56
    %v60 = vmul.f32 %v49, %v57
    %v61 = vadd.f32 %v59, %v60
    %62 = vadd.xlane.f32.xlu0 %v61
    %v63 = vpop.xlane.xlu0 %62
    %v64 = vadd.f32 %v58, %v63
    %vm65 = vcmask 7168
    %66 = vst.msk [vmem:[#allocation2] sm:$0xff] %vm65, %v64
    %v67 = vld [vmem:[#allocation3] sm:$0xff]
    %v68 = vadd.f32 %v48, %v56
    %v69 = vadd.f32 %v49, %v57
    %v70 = vadd.f32 %v68, %v69
    %71 = vadd.xlane.f32.xlu0 %v70
    %v72 = vpop.xlane.xlu0 %71
    %v73 = vadd.f32 %v67, %v72
    %74 = vst.msk [vmem:[#allocation3] sm:$0xff] %vm65, %v73
    // Predicated region
    $region22: #{tpu_custom_call.1} parent=1 // pred_check
      %p75 = pneg %p35
    $region23: #{tpu_custom_call.1} parent=1 // pred_check_branch
      %77 = sbr.rel (%p75) target = $region25
    $region24: #{tpu_custom_call.1} parent=1 // pred_region
      %v78 = vld [vmem:[#allocation2] sm:$0xff]
      %v79 = vmul.f32 %v78, 2.0
      %v80 = vadd.f32 %v79, 1e-05
      %v81 = vld [vmem:[#allocation3] sm:$0xff]
      %v82 = vadd.f32 %v81, 1e-05
      %v83 = vrcp.pop %v82
      %v84 = vmul.f32 %v80, %v83
      %85 = vst.msk [vmem:[%s2] sm:$0xff] %vm65, %v84
    $region25: #{tpu_custom_call.1} parent=1 // pred_fallthru
      _
    // Predicated region
    $region26: #{tpu_custom_call.1} parent=1 // pred_check
      _
    $region27: #{tpu_custom_call.1} parent=1 // pred_check_branch
      %87 = sbr.rel (0) target = $region29
    $region28: #{tpu_custom_call.1} parent=1 // pred_region
      _
    $region29: #{tpu_custom_call.1} parent=1 // pred_fallthru
      _
    // Predicated region
    $region30: #{tpu_custom_call.1} parent=1 // pred_check
      _
    $region31: #{tpu_custom_call.1} parent=1 // pred_check_branch
      %89 = sbr.rel (0) target = $region33
    $region32: #{tpu_custom_call.1} parent=1 // pred_region
      _
    $region33: #{tpu_custom_call.1} parent=1 // pred_fallthru
      _
    %90 = vsyncpa [#allocation5], 1
    %91 = vsyncpa [#allocation7], 1

</llo_original>
